<compile_context>
chip_gen: v5e
topology: v5e:2x2
jax: 0.10.0
libtpu: 0.0.40
codegen_flags: <defaults>
</compile_context>

<pallas_src>
import functools

import jax
import jax.numpy as jnp
from jax.experimental import pallas as pl
from jax.experimental.pallas import tpu as pltpu


def _sublayer_connection_kernel(*refs, eps, dropout_p, training):
    # refs: x, gamma, beta, w, b, [dropout bits], out, ln_scratch
    use_dropout = training and 0.0 < dropout_p < 1.0
    if use_dropout:
        x_ref, gamma_ref, beta_ref, w_ref, b_ref, bits_ref, o_ref, ln_ref = refs
    else:
        x_ref, gamma_ref, beta_ref, w_ref, b_ref, o_ref, ln_ref = refs
        bits_ref = None

    j = pl.program_id(1)

    # --- LayerNorm over the hidden axis (biased variance, PyTorch semantics), computed
    #     once per row tile and cached in VMEM in the MXU-feed dtype. Note: if the
    #     weight is bf16 (or prefer_bf16_matmul), the LN result is intentionally
    #     downcast to bf16 here for full-rate MXU feeding (precision choice).
    @pl.when(j == 0)
    def _():
        xf = x_ref[...].astype(jnp.float32)
        mean = jnp.mean(xf, axis=-1, keepdims=True)
        var = jnp.mean(jnp.square(xf - mean), axis=-1, keepdims=True)
        xn = (xf - mean) * jax.lax.rsqrt(var + eps)
        ln = xn * gamma_ref[...] + beta_ref[...]          # gamma/beta are f32 (1, H)
        ln_ref[...] = ln.astype(ln_ref.dtype)

    # --- sublayer: Linear(H, H), N-tiled. MXU fed in the weight's native dtype,
    #     f32 accumulation.
    sub = jnp.dot(ln_ref[...], w_ref[...], preferred_element_type=jnp.float32)
    sub = sub + b_ref[...]                                # bias is f32 (1, tn)

    # --- inverted dropout. The 1/(1-p) scale is folded into gamma/beta/bias in the
    #     wrapper, so only a select remains here. Identity in eval mode.
    if use_dropout:
        thresh = jnp.uint32(min(int(round(dropout_p * 4294967296.0)), 4294967295))
        keep = bits_ref[...] >= thresh
        sub = jnp.where(keep, sub, 0.0)
    elif training and dropout_p >= 1.0:
        sub = jnp.zeros_like(sub)

    # --- residual add: only this N-tile's columns of x.
    tn = o_ref.shape[-1]
    if tn == x_ref.shape[-1]:
        x_res = x_ref[...]                                 # single N-tile: no slicing
    else:
        col0 = pl.multiple_of(j * tn, tn)                  # tn is a multiple of 128
        x_res = x_ref[:, pl.ds(col0, tn)]

    o_ref[...] = (x_res.astype(jnp.float32) + sub).astype(o_ref.dtype)


def _pick_tile_n(hidden):
    # Largest lane-dense N tile that divides hidden; odd hidden keeps the full axis.
    for tn in (512, 256, 128):
        if hidden % tn == 0:
            return tn
    return hidden


def _vmem_capacity_bytes():
    try:
        info = pltpu.get_tpu_info()
        cap = getattr(info, "vmem_capacity_bytes", None)
        if cap:
            return int(cap)
    except Exception:
        pass
    return 64 * 2 ** 20   # conservative default (v7x per-core / unknown backend)


def sublayer_connection(x, gamma, beta, w, b, *, dropout_p=0.1, training=False,
                        rng_key=None, eps=1e-5, row_tile=None,
                        prefer_bf16_matmul=False):
    B, S, H = x.shape
    R = B * S
    x2 = x.reshape(R, H)

    # Tiny per-feature params kept f32 (PyTorch default); fold the inverted-dropout
    # scale in here instead of spending a full-tile VPU multiply per grid step.
    gamma = gamma.reshape(1, H).astype(jnp.float32)
    beta = beta.reshape(1, H).astype(jnp.float32)
    b = b.reshape(1, H).astype(jnp.float32)
    use_dropout = bool(training) and 0.0 < float(dropout_p) < 1.0
    if use_dropout:
        scale = 1.0 / (1.0 - float(dropout_p))
        gamma = gamma * scale
        beta = beta * scale
        b = b * scale

    # Optional bf16 MXU feed for the f32 path (full-rate MXU on v5e/v6e/v7x).
    if prefer_bf16_matmul and w.dtype == jnp.float32:
        w = w.astype(jnp.bfloat16)

    # Chip-aware tiling / VMEM budget.
    big_vmem = _vmem_capacity_bytes() >= 100 * 2 ** 20    # v5e/v6e: 128 MiB; v7x: 64 MiB
    if row_tile is None:
        row_tile = 512 if big_vmem else 256
    sublane = 16 if x.dtype == jnp.bfloat16 else 8
    rt = max(sublane, min(int(row_tile), pl.cdiv(R, sublane) * sublane))
    rt = pl.cdiv(rt, sublane) * sublane

    tn = _pick_tile_n(H)
    n_i, n_j = pl.cdiv(R, rt), H // tn

    x_sz = x.dtype.itemsize
    w_sz = w.dtype.itemsize

    est = (2 * rt * H * x_sz                              # x blocks (double-buffered)
           + 2 * rt * tn * x_sz                           # out blocks
           + 2 * H * tn * w_sz                            # weight blocks
           + rt * H * w_sz                                # LayerNorm cache scratch
           + (2 * rt * tn * 4 if use_dropout else 0)      # dropout-bit blocks
           + 2 * (2 * H + tn) * 4                         # gamma / beta / bias
           + 4 * rt * H * 4)                              # f32 intermediates headroom
    cap = (96 if big_vmem else 48) * 2 ** 20
    vmem_limit = int(min(cap, max(32 * 2 ** 20, 2 * est)))

    cost = pl.CostEstimate(
        flops=2 * R * H * H + 10 * R * H,
        transcendentals=R,                                # one rsqrt per row (LN cached)
        bytes_accessed=(2 * R * H * x_sz                  # x in + out
                        + n_i * H * H * w_sz              # weight re-streamed per row tile
                        + (R * H * 4 if use_dropout else 0)
                        + 3 * H * 4),
    )

    kernel = functools.partial(_sublayer_connection_kernel,
                               eps=float(eps), dropout_p=float(dropout_p),
                               training=bool(training))

    in_specs = [
        pl.BlockSpec((rt, H), lambda i, j: (i, 0)),       # x rows, full hidden
        pl.BlockSpec((1, H), lambda i, j: (0, 0)),        # gamma
        pl.BlockSpec((1, H), lambda i, j: (0, 0)),        # beta
        pl.BlockSpec((H, tn), lambda i, j: (0, j)),       # weight N-tile
        pl.BlockSpec((1, tn), lambda i, j: (0, j)),       # bias N-tile
    ]
    args = [x2, gamma, beta, w, b]
    if use_dropout:
        if rng_key is None:
            rng_key = jax.random.PRNGKey(0)
        # TODO(synk): on real TPU, pltpu.prng_seed/prng_random_bits would generate the
        # mask in-kernel (no extra HBM stream), but those primitives have no
        # CPU/interpret lowering, so portable host-generated bits are streamed instead.
        # The mask cannot bit-match torch's RNG stream; semantics (inverted dropout)
        # are identical.
        bits = jax.random.bits(rng_key, (R, H), dtype=jnp.uint32)
        in_specs.append(pl.BlockSpec((rt, tn), lambda i, j: (i, j)))
        args.append(bits)

    out = pl.pallas_call(
        kernel,
        out_shape=jax.ShapeDtypeStruct((R, H), x.dtype),
        grid=(n_i, n_j),
        in_specs=in_specs,
        out_specs=pl.BlockSpec((rt, tn), lambda i, j: (i, j)),
        scratch_shapes=[pltpu.VMEM((rt, H), w.dtype)],    # LayerNorm cache (MXU dtype)
        compiler_params=pltpu.CompilerParams(
            dimension_semantics=("parallel", "arbitrary"),
            vmem_limit_bytes=vmem_limit),
        cost_estimate=cost,
    )(*args)

    return out.reshape(B, S, H)


def _reference_eval(x, gamma, beta, w, b, eps=1e-5):
    xf = x.astype(jnp.float32)
    mean = jnp.mean(xf, axis=-1, keepdims=True)
    var = jnp.mean(jnp.square(xf - mean), axis=-1, keepdims=True)
    ln = ((xf - mean) / jnp.sqrt(var + eps) * gamma.astype(jnp.float32)
          + beta.astype(jnp.float32))
    sub = jnp.einsum("bsh,hk->bsk", ln, w.astype(jnp.float32)) + b.astype(jnp.float32)
    return xf + sub  # dropout is identity in eval mode


if __name__ == "__main__":
    batch, seq, hidden = 2, 8, 128   # hidden is lane-dense (multiple of 128)
    dropout_p = 0.1

    key = jax.random.PRNGKey(0)
    kx, kw, kd = jax.random.split(key, 3)

    x = jax.random.normal(kx, (batch, seq, hidden), dtype=jnp.float32)

    # Deterministic params (nn.LayerNorm default affine init; deterministic Linear sublayer).
    gamma = jnp.ones((hidden,), jnp.float32)
    beta = jnp.zeros((hidden,), jnp.float32)
    w = (jax.random.normal(kw, (hidden, hidden), dtype=jnp.float32)
         * (1.0 / jnp.sqrt(hidden)))
    b = jnp.zeros((hidden,), jnp.float32)

    # --- f32, eval mode (dropout = identity): deterministic correctness check.
    out = sublayer_connection(x, gamma, beta, w, b,
                              dropout_p=dropout_p, training=False)
    out = jax.block_until_ready(out)
    ref = _reference_eval(x, gamma, beta, w, b)
    assert out.shape == x.shape
    assert jnp.allclose(out, ref, atol=2e-4, rtol=2e-4), "f32 mismatch vs reference"

    # --- bf16 path: bf16 MXU feed with f32 accumulation.
    xbf = x.astype(jnp.bfloat16)
    wbf = w.astype(jnp.bfloat16)
    out_bf = sublayer_connection(xbf, gamma, beta, wbf, b,
                                 dropout_p=dropout_p, training=False)
    out_bf = jax.block_until_ready(out_bf)
    ref_bf = _reference_eval(xbf, gamma, beta, wbf, b)
    assert out_bf.shape == x.shape
    assert jnp.allclose(out_bf.astype(jnp.float32), ref_bf, atol=1e-1, rtol=1e-1), \
        "bf16 mismatch vs reference"

    # --- f32 inputs with bf16 MXU feed (perf path; looser tolerance by design).
    out_fast = sublayer_connection(x, gamma, beta, w, b, dropout_p=dropout_p,
                                   training=False, prefer_bf16_matmul=True)
    out_fast = jax.block_until_ready(out_fast)
    assert jnp.allclose(out_fast, ref, atol=5e-2, rtol=5e-2), \
        "bf16-MXU-feed mismatch vs reference"

    # --- training-mode dropout path (host-generated bits; exercises the masked branch).
    out_tr = sublayer_connection(x, gamma, beta, w, b,
                                 dropout_p=dropout_p, training=True, rng_key=kd)
    out_tr = jax.block_until_ready(out_tr)
    assert out_tr.shape == x.shape
    assert bool(jnp.all(jnp.isfinite(out_tr)))
    d = out_tr - x                                 # dropped elements are exactly 0
    expect = (ref - x) / (1.0 - dropout_p)         # kept elements = sublayer/(1-p)
    kept = d != 0.0
    frac_dropped = 1.0 - float(jnp.mean(kept.astype(jnp.float32)))
    assert 0.01 < frac_dropped < 0.3, "dropout rate implausible"
    ok = jnp.where(kept, jnp.isclose(d, expect, atol=1e-3, rtol=1e-3), True)
    assert bool(jnp.all(ok)), "kept dropout values mismatch"

    print("KERNEL_OK")
</pallas_src>

<mosaic_0001>
module attributes {stable_mosaic.version = 11 : i64} {
  func.func @_sublayer_connection_kernel(%arg0: i32, %arg1: i32, %arg2: memref<16x128xf32, #tpu.memory_space<vmem>>, %arg3: memref<1x128xf32, #tpu.memory_space<vmem>>, %arg4: memref<1x128xf32, #tpu.memory_space<vmem>>, %arg5: memref<128x128xf32, #tpu.memory_space<vmem>>, %arg6: memref<1x128xf32, #tpu.memory_space<vmem>>, %arg7: memref<16x128xf32, #tpu.memory_space<vmem>>, %arg8: memref<16x128xf32, #tpu.memory_space<vmem>>) attributes {dimension_semantics = [#tpu.dimension_semantics<parallel>, #tpu.dimension_semantics<arbitrary>], iteration_bounds = array<i64: 1, 1>, scalar_prefetch = 0 : i64, scratch_operands = 1 : i64, tpu.core_type = #tpu.core_type<tc>, window_params = [{transform_indices = @transform_0, window_bounds = array<i64: 16, 128>}, {pipeline_mode = #tpu.pipeline_mode<synchronous>, transform_indices = @transform_1, window_bounds = array<i64: 1, 128>}, {pipeline_mode = #tpu.pipeline_mode<synchronous>, transform_indices = @transform_2, window_bounds = array<i64: 1, 128>}, {transform_indices = @transform_3, window_bounds = array<i64: 128, 128>}, {transform_indices = @transform_4, window_bounds = array<i64: 1, 128>}, {transform_indices = @transform_5, window_bounds = array<i64: 16, 128>}]} {
    %c0_i32 = arith.constant 0 : i32
    %0 = arith.cmpi eq, %arg1, %c0_i32 : i32
    %1 = arith.extui %0 : i1 to i32
    %c0_i32_0 = arith.constant 0 : i32
    %2 = arith.cmpi ne, %1, %c0_i32_0 : i32
    scf.if %2 {
      %c0_10 = arith.constant 0 : index
      %c0_11 = arith.constant 0 : index
      %12 = vector.load %arg2[%c0_10, %c0_11] : memref<16x128xf32, #tpu.memory_space<vmem>>, vector<16x128xf32>
      %cst_12 = arith.constant dense<0.000000e+00> : vector<16xf32>
      %13 = vector.multi_reduction <add>, %12, %cst_12 [1] : vector<16x128xf32> to vector<16xf32>
      %14 = vector.shape_cast %13 : vector<16xf32> to vector<16x1xf32>
      %cst_13 = arith.constant 1.280000e+02 : f32
      %15 = vector.broadcast %cst_13 : f32 to vector<16x1xf32>
      %16 = arith.divf %14, %15 : vector<16x1xf32>
      %17 = vector.broadcast %16 : vector<16x1xf32> to vector<16x128xf32>
      %18 = arith.subf %12, %17 : vector<16x128xf32>
      %19 = arith.mulf %18, %18 : vector<16x128xf32>
      %cst_14 = arith.constant dense<0.000000e+00> : vector<16xf32>
      %20 = vector.multi_reduction <add>, %19, %cst_14 [1] : vector<16x128xf32> to vector<16xf32>
      %21 = vector.shape_cast %20 : vector<16xf32> to vector<16x1xf32>
      %cst_15 = arith.constant 1.280000e+02 : f32
      %22 = vector.broadcast %cst_15 : f32 to vector<16x1xf32>
      %23 = arith.divf %21, %22 : vector<16x1xf32>
      %24 = vector.broadcast %16 : vector<16x1xf32> to vector<16x128xf32>
      %25 = arith.subf %12, %24 : vector<16x128xf32>
      %cst_16 = arith.constant 9.99999974E-6 : f32
      %26 = vector.broadcast %cst_16 : f32 to vector<16x1xf32>
      %27 = arith.addf %23, %26 : vector<16x1xf32>
      %28 = math.rsqrt %27 : vector<16x1xf32>
      %29 = vector.broadcast %28 : vector<16x1xf32> to vector<16x128xf32>
      %30 = arith.mulf %25, %29 : vector<16x128xf32>
      %c0_17 = arith.constant 0 : index
      %c0_18 = arith.constant 0 : index
      %31 = vector.load %arg3[%c0_17, %c0_18] : memref<1x128xf32, #tpu.memory_space<vmem>>, vector<1x128xf32>
      %32 = vector.broadcast %31 : vector<1x128xf32> to vector<16x128xf32>
      %33 = arith.mulf %30, %32 : vector<16x128xf32>
      %c0_19 = arith.constant 0 : index
      %c0_20 = arith.constant 0 : index
      %34 = vector.load %arg4[%c0_19, %c0_20] : memref<1x128xf32, #tpu.memory_space<vmem>>, vector<1x128xf32>
      %35 = vector.broadcast %34 : vector<1x128xf32> to vector<16x128xf32>
      %36 = arith.addf %33, %35 : vector<16x128xf32>
      %c0_21 = arith.constant 0 : index
      %c0_22 = arith.constant 0 : index
      %37 = vector.load %arg8[%c0_21, %c0_22] : memref<16x128xf32, #tpu.memory_space<vmem>>, vector<16x128xf32>
      tpu.vector_store %arg8[%c0_21, %c0_22], %36 {strides = array<i32>} : memref<16x128xf32, #tpu.memory_space<vmem>>, vector<16x128xf32>,
    } else {
    }
    %c0 = arith.constant 0 : index
    %c0_1 = arith.constant 0 : index
    %3 = vector.load %arg8[%c0, %c0_1] : memref<16x128xf32, #tpu.memory_space<vmem>>, vector<16x128xf32>
    %c0_2 = arith.constant 0 : index
    %c0_3 = arith.constant 0 : index
    %4 = vector.load %arg5[%c0_2, %c0_3] : memref<128x128xf32, #tpu.memory_space<vmem>>, vector<128x128xf32>
    %cst = arith.constant dense<0.000000e+00> : vector<16x128xf32>
    %5 = tpu.matmul %3, %4, %cst {dimension_numbers = #tpu.dot_dimension_numbers<[1], [0], [0], [1], [0, 0, 1, 1], [], []>} : vector<16x128xf32>, vector<128x128xf32>, vector<16x128xf32> -> vector<16x128xf32>
    %c0_4 = arith.constant 0 : index
    %c0_5 = arith.constant 0 : index
    %6 = vector.load %arg6[%c0_4, %c0_5] : memref<1x128xf32, #tpu.memory_space<vmem>>, vector<1x128xf32>
    %7 = vector.broadcast %6 : vector<1x128xf32> to vector<16x128xf32>
    %8 = arith.addf %5, %7 : vector<16x128xf32>
    %c0_6 = arith.constant 0 : index
    %c0_7 = arith.constant 0 : index
    %9 = vector.load %arg2[%c0_6, %c0_7] : memref<16x128xf32, #tpu.memory_space<vmem>>, vector<16x128xf32>
    %10 = arith.addf %9, %8 : vector<16x128xf32>
    %c0_8 = arith.constant 0 : index
    %c0_9 = arith.constant 0 : index
    %11 = vector.load %arg7[%c0_8, %c0_9] : memref<16x128xf32, #tpu.memory_space<vmem>>, vector<16x128xf32>
    tpu.vector_store %arg7[%c0_8, %c0_9], %10 {strides = array<i32>} : memref<16x128xf32, #tpu.memory_space<vmem>>, vector<16x128xf32>,
    return
  }
  func.func @transform_0(%arg0: i32, %arg1: i32) -> (i32, i32) {
    %c0_i32 = arith.constant 0 : i32
    %c0_i32_0 = arith.constant 0 : i32
    return %arg0, %c0_i32 : i32, i32
  }
  func.func @transform_1(%arg0: i32, %arg1: i32) -> (i32, i32) {
    %c0_i32 = arith.constant 0 : i32
    %c0_i32_0 = arith.constant 0 : i32
    %c0_i32_1 = arith.constant 0 : i32
    return %c0_i32, %c0_i32_0 : i32, i32
  }
  func.func @transform_2(%arg0: i32, %arg1: i32) -> (i32, i32) {
    %c0_i32 = arith.constant 0 : i32
    %c0_i32_0 = arith.constant 0 : i32
    %c0_i32_1 = arith.constant 0 : i32
    return %c0_i32, %c0_i32_0 : i32, i32
  }
  func.func @transform_3(%arg0: i32, %arg1: i32) -> (i32, i32) {
    %c0_i32 = arith.constant 0 : i32
    %c0_i32_0 = arith.constant 0 : i32
    return %c0_i32, %arg1 : i32, i32
  }
  func.func @transform_4(%arg0: i32, %arg1: i32) -> (i32, i32) {
    %c0_i32 = arith.constant 0 : i32
    %c0_i32_0 = arith.constant 0 : i32
    return %c0_i32, %arg1 : i32, i32
  }
  func.func @transform_5(%arg0: i32, %arg1: i32) -> (i32, i32) {
    %c0_i32 = arith.constant 0 : i32
    return %arg0, %arg1 : i32, i32
  }
}

</mosaic_0001>

<llo_original>
// kernel: tpu_custom_call.1
$region0: #{tpu_custom_call.1}
  #allocation0 [shape = 'u32[]', space=smem, size = 0x4, offset = 0x4, fixed_abs, tag = 'smem constant byte address 0x4 - core index']
  #allocation1 [shape = 'u32[72,128]{1,0:T(1,128)}', space=vmem, size = 0x9000, scoped, tag = 'internal scratch']
  #allocation2 [shape = 'f32[16,128]{1,0:T(8,128)}', space=vmem, size = 0x2000, scoped, tag = 'scratch operand']
  %s0 = inlined_call_operand.hbm [shape: f32[16,128], index: 0, kind: input, shape index: {}]
  %s1 = inlined_call_operand.hbm [shape: f32[1,128], index: 1, kind: input, shape index: {}]
  %s2 = inlined_call_operand.vmem [shape: f32[1,128], index: 2, kind: input, shape index: {}]
  %s3 = inlined_call_operand.hbm [shape: f32[128,128], index: 3, kind: input, shape index: {}]
  %s4 = inlined_call_operand.vmem [shape: f32[1,128], index: 4, kind: input, shape index: {}]
  %s5 = inlined_call_operand.hbm [shape: f32[16,128], index: 5, kind: output, shape index: {}]
  %s6 = sld [smem:[#allocation0]]
  $region46: #{tpu_custom_call.1} parent=0
    _
  %s8 = ssub.s32 1, %s6
  %s9 = scalar_select 0, %s8, %s6
  $region1: #{tpu_custom_call.1} parent=0
    #allocation3 [shape = 'u8[8192]{0}', space=vmem, size = 0x2000, scoped, tag = 'input window, operand 0, single buffered']
    #allocation4 [shape = 's32[1]{0}', space=sflag, size = 0x4, scoped, tag = 'scoped memory for tpu_custom_call.1']
    #allocation5 [shape = 's32[1]{0}', space=sflag, size = 0x4, scoped, tag = 'scoped memory for tpu_custom_call.1']
    #allocation6 [shape = 'u8[512]{0}', space=vmem, size = 0x400, scoped, tag = 'input window, operand 1, single buffered']
    #allocation7 [shape = 's32[1]{0}', space=sflag, size = 0x4, scoped, tag = 'scoped memory for tpu_custom_call.1']
    #allocation8 [shape = 'u8[65536]{0}', space=vmem, size = 0x10000, scoped, tag = 'input window, operand 3, single buffered']
    #allocation9 [shape = 'u8[8192]{0}', space=vmem, size = 0x2000, scoped, tag = 'output window, operand 0, single buffered']
    %10 = vsyncpa [#allocation4], 0
    %11 = vsyncpa [#allocation7], 0
    %12 = vsyncpa [#allocation5], 0
    // Predicated region
    $region2: #{tpu_custom_call.1} parent=1 // pred_check
      _
    $region3: #{tpu_custom_call.1} parent=1 // pred_check_branch
      %14 = sbr.rel (0) target = $region5
    $region4: #{tpu_custom_call.1} parent=1 // pred_region
      %16 = vsyncadd [#allocation4], 0
      %s17 = sshll.u32 %s0, 4
      %s18 = int_to_ptr.hbm [resolvable:$true] %s17
      %s19 = sshll.u32 [#allocation3], 4
      %s20 = int_to_ptr.vmem [resolvable:$true] %s19
      %25 = dma.hbm_to_vmem [thread:$0]  %s18, 256, %s20, [#allocation4], 128, 128, 8
    $region5: #{tpu_custom_call.1} parent=1 // pred_fallthru
      _
    // Predicated region
    $region6: #{tpu_custom_call.1} parent=1 // pred_check
      _
    $region7: #{tpu_custom_call.1} parent=1 // pred_check_branch
      %27 = sbr.rel (0) target = $region9
    $region8: #{tpu_custom_call.1} parent=1 // pred_region
      %29 = vsyncadd [#allocation7], 0
      %s31 = sshll.u32 %s1, 4
      %s32 = int_to_ptr.hbm [resolvable:$true] %s31
      %s33 = sshll.u32 [#allocation6], 4
      %s34 = int_to_ptr.vmem [resolvable:$true] %s33
      %36 = dma.hbm_to_vmem [thread:$0]  %s32, 16, %s34, [#allocation7]
    $region9: #{tpu_custom_call.1} parent=1 // pred_fallthru
      _
    // Predicated region
    $region10: #{tpu_custom_call.1} parent=1 // pred_check
      _
    $region11: #{tpu_custom_call.1} parent=1 // pred_check_branch
      %38 = sbr.rel (0) target = $region13
    $region12: #{tpu_custom_call.1} parent=1 // pred_region
      _
    $region13: #{tpu_custom_call.1} parent=1 // pred_fallthru
      _
    // Predicated region
    $region14: #{tpu_custom_call.1} parent=1 // pred_check
      _
    $region15: #{tpu_custom_call.1} parent=1 // pred_check_branch
      %40 = sbr.rel (0) target = $region17
    $region16: #{tpu_custom_call.1} parent=1 // pred_region
      %42 = vsyncadd [#allocation7], 0
      %s43 = sshll.u32 %s3, 4
      %s44 = int_to_ptr.hbm [resolvable:$true] %s43
      %s45 = sshll.u32 [#allocation8], 4
      %s46 = int_to_ptr.vmem [resolvable:$true] %s45
      %51 = dma.hbm_to_vmem [thread:$0]  %s44, 2048, %s46, [#allocation7], 128, 128, 8
    $region17: #{tpu_custom_call.1} parent=1 // pred_fallthru
      _
    // Predicated region
    $region18: #{tpu_custom_call.1} parent=1 // pred_check
      _
    $region19: #{tpu_custom_call.1} parent=1 // pred_check_branch
      %53 = sbr.rel (0) target = $region21
    $region20: #{tpu_custom_call.1} parent=1 // pred_region
      _
    $region21: #{tpu_custom_call.1} parent=1 // pred_fallthru
      _
    // Predicated region
    $region22: #{tpu_custom_call.1} parent=1 // pred_check
      _
    $region23: #{tpu_custom_call.1} parent=1 // pred_check_branch
      %55 = sbr.rel (0) target = $region25
    $region24: #{tpu_custom_call.1} parent=1 // pred_region
      %57 = dma.done [#allocation4], 256
    $region25: #{tpu_custom_call.1} parent=1 // pred_fallthru
      _
    // Predicated region
    $region26: #{tpu_custom_call.1} parent=1 // pred_check
      _
    $region27: #{tpu_custom_call.1} parent=1 // pred_check_branch
      %59 = sbr.rel (0) target = $region29
    $region28: #{tpu_custom_call.1} parent=1 // pred_region
      %61 = dma.done [#allocation7], 16
    $region29: #{tpu_custom_call.1} parent=1 // pred_fallthru
      _
    // Predicated region
    $region30: #{tpu_custom_call.1} parent=1 // pred_check
      _
    $region31: #{tpu_custom_call.1} parent=1 // pred_check_branch
      %63 = sbr.rel (0) target = $region33
    $region32: #{tpu_custom_call.1} parent=1 // pred_region
      %65 = dma.done [#allocation7], 2048
    $region33: #{tpu_custom_call.1} parent=1 // pred_fallthru
      _
    %p66 = scmp.eq.s32.totalorder 0, 0
    // Predicated region
    $region34: #{tpu_custom_call.1} parent=1 // pred_check
      %p67 = pneg %p66
    $region35: #{tpu_custom_call.1} parent=1 // pred_check_branch
      %69 = sbr.rel (%p67) target = $region37
    $region36: #{tpu_custom_call.1} parent=1 // pred_region
      %v70 = vld [vmem:[#allocation3] sm:$0xff]
      %v71 = vld [vmem:[#allocation3 + $0x8] sm:$0xff]
      %72 = vadd.xlane.f32.xlu0 %v70
      %v73 = vpop.xlane.xlu0 %72
      %74 = vadd.xlane.f32.xlu0 %v71
      %v75 = vpop.xlane.xlu0 %74
      %v76 = vrcp.pop 128.0
      %v77 = vmul.f32 128.0, %v76
      %v78 = vsub.f32 1.0, %v77
      %v79 = vmul.f32 %v76, %v78
      %v80 = vadd.f32 %v76, %v79
      %vm81 = vweird.f32 %v76
      %v82 = vsel %vm81, %v76, %v80
      %v83 = vmul.f32 %v73, %v82
      %v84 = vmul.f32 %v75, %v82
      %v85 = vsub.f32 %v70, %v83
      %v86 = vsub.f32 %v71, %v84
      %v87 = vmul.f32 %v85, %v85
      %v88 = vmul.f32 %v86, %v86
      %89 = vadd.xlane.f32.xlu0 %v87
      %v90 = vpop.xlane.xlu0 %89
      %91 = vadd.xlane.f32.xlu0 %v88
      %v92 = vpop.xlane.xlu0 %91
      %v93 = vmul.f32 %v90, %v82
      %v94 = vmul.f32 %v92, %v82
      %v95 = vadd.f32 %v93, 1e-05
      %v96 = vadd.f32 %v94, 1e-05
      %v97 = vrsqrt.pop %v95
      %v98 = vmul.f32 %v97, %v95
      %v99 = vmul.f32 %v98, %v97
      %v100 = vmul.f32 0.5, %v99
      %v101 = vsub.f32 1.5, %v100
      %v102 = vmul.f32 %v97, %v101
      %vm103 = vweird.f32 %v95
      %vm104 = vweird.f32 %v97
      %vm105 = vmor %vm103, %vm104
      %v106 = vsel %vm105, %v97, %v102
      %v107 = vrsqrt.pop %v96
      %v108 = vmul.f32 %v107, %v96
      %v109 = vmul.f32 %v108, %v107
      %v110 = vmul.f32 0.5, %v109
      %v111 = vsub.f32 1.5, %v110
      %v112 = vmul.f32 %v107, %v111
      %vm113 = vweird.f32 %v96
      %vm114 = vweird.f32 %v107
      %vm115 = vmor %vm113, %vm114
      %v116 = vsel %vm115, %v107, %v112
      %v117 = vmul.f32 %v85, %v106
      %v118 = vmul.f32 %v86, %v116
      %v119 = vld [vmem:[#allocation6] sm:$0x1]
      %v121 = vperm.slane %v119, 0
      %v123 = vmul.f32 %v117, %v121
      %v124 = vmul.f32 %v118, %v121
      %v125 = vld [vmem:[%s2] sm:$0x1]
      %v127 = vperm.slane %v125, 0
      %v129 = vadd.f32 %v123, %v127
      %v130 = vadd.f32 %v124, %v127
      %131 = vst [vmem:[#allocation2] sm:$0xff] %v129
      %132 = vst [vmem:[#allocation2 + $0x8] sm:$0xff] %v130
    $region37: #{tpu_custom_call.1} parent=1 // pred_fallthru
      _
    %v133 = vld [vmem:[#allocation2] sm:$0xff]
    %v134 = vld [vmem:[#allocation2 + $0x8] sm:$0xff]
    %v135 = vld [vmem:[#allocation8] sm:$0xff]
    %v136 = vld [vmem:[#allocation8 + $0x8] sm:$0xff]
    %v137 = vld [vmem:[#allocation8 + $0x10] sm:$0xff]
    %v138 = vld [vmem:[#allocation8 + $0x18] sm:$0xff]
    %v139 = vld [vmem:[#allocation8 + $0x20] sm:$0xff]
    %v140 = vld [vmem:[#allocation8 + $0x28] sm:$0xff]
    %v141 = vld [vmem:[#allocation8 + $0x30] sm:$0xff]
    %v142 = vld [vmem:[#allocation8 + $0x38] sm:$0xff]
    %v143 = vld [vmem:[#allocation8 + $0x40] sm:$0xff]
    %v144 = vld [vmem:[#allocation8 + $0x48] sm:$0xff]
    %v145 = vld [vmem:[#allocation8 + $0x50] sm:$0xff]
    %v146 = vld [vmem:[#allocation8 + $0x58] sm:$0xff]
    %v147 = vld [vmem:[#allocation8 + $0x60] sm:$0xff]
    %v148 = vld [vmem:[#allocation8 + $0x68] sm:$0xff]
    %v149 = vld [vmem:[#allocation8 + $0x70] sm:$0xff]
    %v150 = vld [vmem:[#allocation8 + $0x78] sm:$0xff]
    %v151 = vld [vmem:[%s4] sm:$0x1]
    %v153 = vperm.slane %v151, 0
    %155 = vmatpush.msra.mxu0 %v150
    %156 = vmatpush.msra.mxu0 %v149
    %157 = vmatpush.msra.mxu0 %v148
    %158 = vmatpush.msra.mxu0 %v147
    %159 = vmatpush.msra.mxu0 %v146
    %160 = vmatpush.msra.mxu0 %v145
    %161 = vmatpush.msra.mxu0 %v144
    %162 = vmatpush.msra.mxu0 %v143
    %163 = vmatpush.msra.mxu0 %v142
    %164 = vmatpush.msra.mxu0 %v141
    %165 = vmatpush.msra.mxu0 %v140
    %166 = vmatpush.msra.mxu0 %v139
    %167 = vmatpush.msra.mxu0 %v138
    %168 = vmatpush.msra.mxu0 %v137
    %169 = vmatpush.msra.mxu0 %v136
    %170 = vmatpush.msra.mxu0 %v135
    %171 = vmatmul.f32.gmra.mxu0 %v133
    %v172 = vpop.f32.mrf.mxu0
    %v173 = vadd.f32 %v153, %v172
    %174 = vmatmul.f32.gmra.mxu0 %v134
    %v175 = vpop.f32.mrf.mxu0
    %v176 = vadd.f32 %v153, %v175
    %177 = vdwg.mxu0
    %v178 = vld [vmem:[#allocation3] sm:$0xff]
    %v179 = vld [vmem:[#allocation3 + $0x8] sm:$0xff]
    %v180 = vadd.f32 %v178, %v173
    %v181 = vadd.f32 %v179, %v176
    %182 = vst [vmem:[#allocation9] sm:$0xff] %v180
    %183 = vst [vmem:[#allocation9 + $0x8] sm:$0xff] %v181
    // Predicated region
    $region38: #{tpu_custom_call.1} parent=1 // pred_check
      _
    $region39: #{tpu_custom_call.1} parent=1 // pred_check_branch
      %185 = sbr.rel (0) target = $region41
    $region40: #{tpu_custom_call.1} parent=1 // pred_region
      %187 = vsyncadd [#allocation5], 0
      %s188 = sshll.u32 [#allocation9], 4
      %s189 = int_to_ptr.vmem [resolvable:$true] %s188
      %s190 = sshll.u32 %s5, 4
      %s191 = int_to_ptr.hbm [resolvable:$true] %s190
      %196 = dma.vmem_to_hbm [thread:$0]  %s189, 256, %s191, [#allocation5], 128, 128, 8
    $region41: #{tpu_custom_call.1} parent=1 // pred_fallthru
      _
    // Predicated region
    $region42: #{tpu_custom_call.1} parent=1 // pred_check
      _
    $region43: #{tpu_custom_call.1} parent=1 // pred_check_branch
      %198 = sbr.rel (0) target = $region45
    $region44: #{tpu_custom_call.1} parent=1 // pred_region
      %200 = dma.done [#allocation5], 256
    $region45: #{tpu_custom_call.1} parent=1 // pred_fallthru
      _
    %201 = vsyncpa [#allocation4], 1
    %202 = vsyncpa [#allocation7], 1
    %203 = vsyncpa [#allocation5], 1

</llo_original>
